<compile_context>
chip_gen: v7x
topology: tpu7x:2x2x1
jax: 0.10.0
libtpu: 0.0.40
codegen_flags: <defaults>
</compile_context>

<pallas_src>
import jax
import jax.numpy as jnp
from jax.experimental import pallas as pl
from jax.experimental.pallas import tpu as pltpu

D_IN, D_H1, D_H2, D_OUT = 36, 72, 144, 36


def _round_up(n, m):
    return ((n + m - 1) // m) * m


def _mlp_kernel(x_ref, w1_ref, b1_ref, w2_ref, b2_ref, w3_ref, b3_ref, o_ref):
    # Layer 1: (TB,36) @ (36,72) + (1,72) -> relu
    h = jnp.dot(x_ref[...], w1_ref[...], preferred_element_type=jnp.float32)
    h = jnp.maximum(h + b1_ref[...], 0.0)
    # Layer 2: (TB,72) @ (72,144) + (1,144) -> relu
    h = jnp.dot(h, w2_ref[...], preferred_element_type=jnp.float32)
    h = jnp.maximum(h + b2_ref[...], 0.0)
    # Layer 3: (TB,144) @ (144,36) + (1,36) -> relu
    h = jnp.dot(h, w3_ref[...], preferred_element_type=jnp.float32)
    h = jnp.maximum(h + b3_ref[...], 0.0)
    o_ref[...] = h.astype(o_ref.dtype)


def _choose_tiling(B, tb_max):
    """Pick (TB, B_pad, grid) minimizing padded rows; even grid for v7x."""
    tb_max = max(8, _round_up(tb_max, 8))
    grid = -(-B // tb_max)                       # cdiv(B, tb_max)
    if grid > 1 and grid % 2 == 1:
        grid += 1                                # even #steps balances dual-TC v7x
    TB = _round_up(-(-B // grid), 8)             # smallest mult-of-8 tile covering B
    return TB, TB * grid, grid


def so_combination_net(x, params, *, tb_max=2048):
    """x: (B, 36) float32. params: w1,b1,w2,b2,w3,b3 with w stored as (in, out)."""
    B = x.shape[0]
    w1, b1 = params["w1"], params["b1"]
    w2, b2 = params["w2"], params["b2"]
    w3, b3 = params["w3"], params["b3"]

    TB, B_pad, grid = _choose_tiling(B, tb_max)
    if B_pad != B:
        x = jnp.pad(x, ((0, B_pad - B), (0, 0)))

    # Full-array resident blocks for weights/biases (constant index map).
    const2 = lambda a: pl.BlockSpec(a.shape, lambda i: (0, 0))

    flops = 2 * B_pad * (D_IN * D_H1 + D_H1 * D_H2 + D_H2 * D_OUT)
    weight_bytes = 4 * (D_IN * D_H1 + D_H1 + D_H1 * D_H2 + D_H2
                        + D_H2 * D_OUT + D_OUT)
    bytes_accessed = 4 * B_pad * (D_IN + D_OUT) + weight_bytes

    out = pl.pallas_call(
        _mlp_kernel,
        out_shape=jax.ShapeDtypeStruct((B_pad, D_OUT), jnp.float32),
        grid=(grid,),
        in_specs=[
            pl.BlockSpec((TB, D_IN), lambda i: (i, 0)),   # x: batch-tiled
            const2(w1), const2(b1),
            const2(w2), const2(b2),
            const2(w3), const2(b3),
        ],
        # Lane width 36 == full array width: one contiguous rectangular DMA per
        # tile, and 144 B/row of HBM writeback instead of 512 B/row.
        out_specs=pl.BlockSpec((TB, D_OUT), lambda i: (i, 0)),
        compiler_params=pltpu.CompilerParams(
            dimension_semantics=("parallel",),
            vmem_limit_bytes=64 * 1024 * 1024),
        cost_estimate=pl.CostEstimate(
            flops=flops, transcendentals=0, bytes_accessed=bytes_accessed),
    )(x, w1, b1, w2, b2, w3, b3)

    return out[:B]


def init_params(key):
    """Deterministic init matching nn.Linear shapes (stored transposed)."""
    ks = jax.random.split(key, 6)

    def linear(kw, kb, fan_in, fan_out):
        bound = 1.0 / jnp.sqrt(fan_in)
        # nn.Linear weight is (out, in); store transposed (in, out) for matmul.
        w = jax.random.uniform(kw, (fan_in, fan_out), jnp.float32, -bound, bound)
        b = jax.random.uniform(kb, (1, fan_out), jnp.float32, -bound, bound)
        return w, b

    w1, b1 = linear(ks[0], ks[1], D_IN, D_H1)
    w2, b2 = linear(ks[2], ks[3], D_H1, D_H2)
    w3, b3 = linear(ks[4], ks[5], D_H2, D_OUT)
    return {"w1": w1, "b1": b1, "w2": w2, "b2": b2, "w3": w3, "b3": b3}


def reference(x, p):
    # Same f32 dtype and default TPU matmul precision as the kernel, so the
    # 1e-5 tolerance compares like against like.
    h = jnp.maximum(jnp.dot(x, p["w1"]) + p["b1"], 0.0)
    h = jnp.maximum(jnp.dot(h, p["w2"]) + p["b2"], 0.0)
    h = jnp.maximum(jnp.dot(h, p["w3"]) + p["b3"], 0.0)
    return h


if __name__ == "__main__":
    key = jax.random.PRNGKey(0)
    kx, kp = jax.random.split(key)
    params = init_params(kp)

    # Small shape check (B=8, single grid step).
    B = 8
    x = jax.random.normal(kx, (B, D_IN), jnp.float32)
    out = jax.block_until_ready(so_combination_net(x, params))
    ref = reference(x, params)
    assert out.shape == (B, D_OUT)
    assert jnp.allclose(out, ref, atol=1e-5, rtol=1e-5)

    # Multi-tile path: B=2050 -> grid=2, TB=1032 (minimal padding, even grid).
    B2 = 2050
    x2 = jax.random.normal(kx, (B2, D_IN), jnp.float32)
    out2 = jax.block_until_ready(so_combination_net(x2, params))
    ref2 = reference(x2, params)
    assert out2.shape == (B2, D_OUT)
    assert jnp.allclose(out2, ref2, atol=1e-5, rtol=1e-5)

    print("KERNEL_OK")
</pallas_src>

<mosaic_0001>
module attributes {stable_mosaic.version = 11 : i64} {
  func.func @_mlp_kernel(%arg0: i32, %arg1: memref<8x36xf32, #tpu.memory_space<vmem>>, %arg2: memref<36x72xf32, #tpu.memory_space<vmem>>, %arg3: memref<1x72xf32, #tpu.memory_space<vmem>>, %arg4: memref<72x144xf32, #tpu.memory_space<vmem>>, %arg5: memref<1x144xf32, #tpu.memory_space<vmem>>, %arg6: memref<144x36xf32, #tpu.memory_space<vmem>>, %arg7: memref<1x36xf32, #tpu.memory_space<vmem>>, %arg8: memref<8x36xf32, #tpu.memory_space<vmem>>) attributes {dimension_semantics = [#tpu.dimension_semantics<parallel>], iteration_bounds = array<i64: 1>, scalar_prefetch = 0 : i64, scratch_operands = 0 : i64, tpu.core_type = #tpu.core_type<tc>, window_params = [{transform_indices = @transform_0, window_bounds = array<i64: 8, 36>}, {pipeline_mode = #tpu.pipeline_mode<synchronous>, transform_indices = @transform_1, window_bounds = array<i64: 36, 72>}, {pipeline_mode = #tpu.pipeline_mode<synchronous>, transform_indices = @transform_2, window_bounds = array<i64: 1, 72>}, {pipeline_mode = #tpu.pipeline_mode<synchronous>, transform_indices = @transform_3, window_bounds = array<i64: 72, 144>}, {pipeline_mode = #tpu.pipeline_mode<synchronous>, transform_indices = @transform_4, window_bounds = array<i64: 1, 144>}, {pipeline_mode = #tpu.pipeline_mode<synchronous>, transform_indices = @transform_5, window_bounds = array<i64: 144, 36>}, {pipeline_mode = #tpu.pipeline_mode<synchronous>, transform_indices = @transform_6, window_bounds = array<i64: 1, 36>}, {transform_indices = @transform_7, window_bounds = array<i64: 8, 36>}]} {
    %c0 = arith.constant 0 : index
    %c0_0 = arith.constant 0 : index
    %0 = vector.load %arg1[%c0, %c0_0] : memref<8x36xf32, #tpu.memory_space<vmem>>, vector<8x36xf32>
    %c0_1 = arith.constant 0 : index
    %c0_2 = arith.constant 0 : index
    %1 = vector.load %arg2[%c0_1, %c0_2] : memref<36x72xf32, #tpu.memory_space<vmem>>, vector<36x72xf32>
    %cst = arith.constant dense<0.000000e+00> : vector<8x72xf32>
    %2 = tpu.matmul %0, %1, %cst {dimension_numbers = #tpu.dot_dimension_numbers<[1], [0], [0], [1], [0, 0, 1, 1], [], []>} : vector<8x36xf32>, vector<36x72xf32>, vector<8x72xf32> -> vector<8x72xf32>
    %c0_3 = arith.constant 0 : index
    %c0_4 = arith.constant 0 : index
    %3 = vector.load %arg3[%c0_3, %c0_4] : memref<1x72xf32, #tpu.memory_space<vmem>>, vector<1x72xf32>
    %4 = vector.broadcast %3 : vector<1x72xf32> to vector<8x72xf32>
    %5 = arith.addf %2, %4 : vector<8x72xf32>
    %cst_5 = arith.constant 0.000000e+00 : f32
    %6 = vector.broadcast %cst_5 : f32 to vector<8x72xf32>
    %7 = arith.maximumf %5, %6 : vector<8x72xf32>
    %c0_6 = arith.constant 0 : index
    %c0_7 = arith.constant 0 : index
    %8 = vector.load %arg4[%c0_6, %c0_7] : memref<72x144xf32, #tpu.memory_space<vmem>>, vector<72x144xf32>
    %cst_8 = arith.constant dense<0.000000e+00> : vector<8x144xf32>
    %9 = tpu.matmul %7, %8, %cst_8 {dimension_numbers = #tpu.dot_dimension_numbers<[1], [0], [0], [1], [0, 0, 1, 1], [], []>} : vector<8x72xf32>, vector<72x144xf32>, vector<8x144xf32> -> vector<8x144xf32>
    %c0_9 = arith.constant 0 : index
    %c0_10 = arith.constant 0 : index
    %10 = vector.load %arg5[%c0_9, %c0_10] : memref<1x144xf32, #tpu.memory_space<vmem>>, vector<1x144xf32>
    %11 = vector.broadcast %10 : vector<1x144xf32> to vector<8x144xf32>
    %12 = arith.addf %9, %11 : vector<8x144xf32>
    %cst_11 = arith.constant 0.000000e+00 : f32
    %13 = vector.broadcast %cst_11 : f32 to vector<8x144xf32>
    %14 = arith.maximumf %12, %13 : vector<8x144xf32>
    %c0_12 = arith.constant 0 : index
    %c0_13 = arith.constant 0 : index
    %15 = vector.load %arg6[%c0_12, %c0_13] : memref<144x36xf32, #tpu.memory_space<vmem>>, vector<144x36xf32>
    %cst_14 = arith.constant dense<0.000000e+00> : vector<8x36xf32>
    %16 = tpu.matmul %14, %15, %cst_14 {dimension_numbers = #tpu.dot_dimension_numbers<[1], [0], [0], [1], [0, 0, 1, 1], [], []>} : vector<8x144xf32>, vector<144x36xf32>, vector<8x36xf32> -> vector<8x36xf32>
    %c0_15 = arith.constant 0 : index
    %c0_16 = arith.constant 0 : index
    %17 = vector.load %arg7[%c0_15, %c0_16] : memref<1x36xf32, #tpu.memory_space<vmem>>, vector<1x36xf32>
    %18 = vector.broadcast %17 : vector<1x36xf32> to vector<8x36xf32>
    %19 = arith.addf %16, %18 : vector<8x36xf32>
    %cst_17 = arith.constant 0.000000e+00 : f32
    %20 = vector.broadcast %cst_17 : f32 to vector<8x36xf32>
    %21 = arith.maximumf %19, %20 : vector<8x36xf32>
    %c0_18 = arith.constant 0 : index
    %c0_19 = arith.constant 0 : index
    %22 = vector.load %arg8[%c0_18, %c0_19] : memref<8x36xf32, #tpu.memory_space<vmem>>, vector<8x36xf32>
    tpu.vector_store %arg8[%c0_18, %c0_19], %21 {strides = array<i32>} : memref<8x36xf32, #tpu.memory_space<vmem>>, vector<8x36xf32>,
    return
  }
  func.func @transform_0(%arg0: i32) -> (i32, i32) {
    %c0_i32 = arith.constant 0 : i32
    %c0_i32_0 = arith.constant 0 : i32
    return %arg0, %c0_i32 : i32, i32
  }
  func.func @transform_1(%arg0: i32) -> (i32, i32) {
    %c0_i32 = arith.constant 0 : i32
    %c0_i32_0 = arith.constant 0 : i32
    %c0_i32_1 = arith.constant 0 : i32
    return %c0_i32, %c0_i32_0 : i32, i32
  }
  func.func @transform_2(%arg0: i32) -> (i32, i32) {
    %c0_i32 = arith.constant 0 : i32
    %c0_i32_0 = arith.constant 0 : i32
    %c0_i32_1 = arith.constant 0 : i32
    return %c0_i32, %c0_i32_0 : i32, i32
  }
  func.func @transform_3(%arg0: i32) -> (i32, i32) {
    %c0_i32 = arith.constant 0 : i32
    %c0_i32_0 = arith.constant 0 : i32
    %c0_i32_1 = arith.constant 0 : i32
    return %c0_i32, %c0_i32_0 : i32, i32
  }
  func.func @transform_4(%arg0: i32) -> (i32, i32) {
    %c0_i32 = arith.constant 0 : i32
    %c0_i32_0 = arith.constant 0 : i32
    %c0_i32_1 = arith.constant 0 : i32
    return %c0_i32, %c0_i32_0 : i32, i32
  }
  func.func @transform_5(%arg0: i32) -> (i32, i32) {
    %c0_i32 = arith.constant 0 : i32
    %c0_i32_0 = arith.constant 0 : i32
    %c0_i32_1 = arith.constant 0 : i32
    return %c0_i32, %c0_i32_0 : i32, i32
  }
  func.func @transform_6(%arg0: i32) -> (i32, i32) {
    %c0_i32 = arith.constant 0 : i32
    %c0_i32_0 = arith.constant 0 : i32
    %c0_i32_1 = arith.constant 0 : i32
    return %c0_i32, %c0_i32_0 : i32, i32
  }
  func.func @transform_7(%arg0: i32) -> (i32, i32) {
    %c0_i32 = arith.constant 0 : i32
    %c0_i32_0 = arith.constant 0 : i32
    return %arg0, %c0_i32 : i32, i32
  }
}

</mosaic_0001>

<llo_original>
// kernel: tpu_custom_call.1
$region0: #{tpu_custom_call.1}
  #allocation0 [shape = 'u32[]', space=smem, size = 0x4, offset = 0x4, fixed_abs, tag = 'smem constant byte address 0x4 - core index']
  #allocation1 [shape = 'u32[144,128]{1,0:T(1,128)}', space=vmem, size = 0x12000, scoped, tag = 'internal scratch']
  %s0 = inlined_call_operand.hbm [shape: f32[8,36], index: 0, kind: input, shape index: {}]
  %s1 = inlined_call_operand.hbm [shape: f32[36,72], index: 1, kind: input, shape index: {}]
  %s2 = inlined_call_operand.hbm [shape: f32[1,72], index: 2, kind: input, shape index: {}]
  %s3 = inlined_call_operand.hbm [shape: f32[72,144], index: 3, kind: input, shape index: {}]
  %s4 = inlined_call_operand.hbm [shape: f32[1,144], index: 4, kind: input, shape index: {}]
  %s5 = inlined_call_operand.hbm [shape: f32[144,36], index: 5, kind: input, shape index: {}]
  %s6 = inlined_call_operand.hbm [shape: f32[1,36], index: 6, kind: input, shape index: {}]
  %s7 = inlined_call_operand.hbm [shape: f32[8,36], index: 7, kind: output, shape index: {}]
  %s8 = sld [smem:[#allocation0]]
  $region66: #{tpu_custom_call.1} parent=0
    _
  %s10 = ssub.s32 1, %s8
  %s11 = scalar_select 0, %s10, %s8
  $region1: #{tpu_custom_call.1} parent=0
    #allocation2 [shape = 'u8[4096]{0}', space=vmem, size = 0x1000, scoped, tag = 'input window, operand 0, single buffered']
    #allocation3 [shape = 's32[1]{0}', space=sflag, size = 0x4, scoped, tag = 'scoped memory for tpu_custom_call.1']
    #allocation4 [shape = 's32[1]{0}', space=sflag, size = 0x4, scoped, tag = 'scoped memory for tpu_custom_call.1']
    #allocation5 [shape = 'u8[20480]{0}', space=vmem, size = 0x5000, scoped, tag = 'input window, operand 1, single buffered']
    #allocation6 [shape = 's32[1]{0}', space=sflag, size = 0x4, scoped, tag = 'scoped memory for tpu_custom_call.1']
    #allocation7 [shape = 'u8[512]{0}', space=vmem, size = 0x400, scoped, tag = 'input window, operand 2, single buffered']
    #allocation8 [shape = 'u8[73728]{0}', space=vmem, size = 0x12000, scoped, tag = 'input window, operand 3, single buffered']
    #allocation9 [shape = 's32[1]{0}', space=sflag, size = 0x4, scoped, tag = 'scoped memory for tpu_custom_call.1']
    #allocation10 [shape = 'u8[1024]{0}', space=vmem, size = 0x400, scoped, tag = 'input window, operand 4, single buffered']
    #allocation11 [shape = 'u8[73728]{0}', space=vmem, size = 0x12000, scoped, tag = 'input window, operand 5, single buffered']
    #allocation12 [shape = 's32[1]{0}', space=sflag, size = 0x4, scoped, tag = 'scoped memory for tpu_custom_call.1']
    #allocation13 [shape = 'u8[512]{0}', space=vmem, size = 0x400, scoped, tag = 'input window, operand 6, single buffered']
    #allocation14 [shape = 'u8[4096]{0}', space=vmem, size = 0x1000, scoped, tag = 'output window, operand 0, single buffered']
    %12 = vsyncpa [#allocation3], 0
    %13 = vsyncpa [#allocation6], 0
    %14 = vsyncpa [#allocation9], 0
    %15 = vsyncpa [#allocation12], 0
    %16 = vsyncpa [#allocation4], 0
    // Predicated region
    $region2: #{tpu_custom_call.1} parent=1 // pred_check
      _
    $region3: #{tpu_custom_call.1} parent=1 // pred_check_branch
      %18 = sbr.rel (0) target = $region5
    $region4: #{tpu_custom_call.1} parent=1 // pred_region
      %s20 = ssub.s32 128, 128
      %21 = vsyncadd [#allocation3], %s20
      %s23 = sshll.u32 [#allocation2], 4
      %s24 = int_to_ptr.vmem [resolvable:$true] %s23
      %26 = dma.hbm_to_vmem [thread:$0]  %s0, 128, %s24, [#allocation3]
    $region5: #{tpu_custom_call.1} parent=1 // pred_fallthru
      _
    // Predicated region
    $region6: #{tpu_custom_call.1} parent=1 // pred_check
      _
    $region7: #{tpu_custom_call.1} parent=1 // pred_check_branch
      %28 = sbr.rel (0) target = $region9
    $region8: #{tpu_custom_call.1} parent=1 // pred_region
      %s30 = ssub.s32 640, 640
      %31 = vsyncadd [#allocation6], %s30
      %s32 = sshll.u32 [#allocation5], 4
      %s33 = int_to_ptr.vmem [resolvable:$true] %s32
      %38 = dma.hbm_to_vmem [thread:$0]  %s1, 640, %s33, [#allocation6], 128, 128, 8
    $region9: #{tpu_custom_call.1} parent=1 // pred_fallthru
      _
    // Predicated region
    $region10: #{tpu_custom_call.1} parent=1 // pred_check
      _
    $region11: #{tpu_custom_call.1} parent=1 // pred_check_branch
      %40 = sbr.rel (0) target = $region13
    $region12: #{tpu_custom_call.1} parent=1 // pred_region
      %s42 = ssub.s32 16, 16
      %43 = vsyncadd [#allocation6], %s42
      %s45 = sshll.u32 [#allocation7], 4
      %s46 = int_to_ptr.vmem [resolvable:$true] %s45
      %48 = dma.hbm_to_vmem [thread:$0]  %s2, 16, %s46, [#allocation6]
    $region13: #{tpu_custom_call.1} parent=1 // pred_fallthru
      _
    // Predicated region
    $region14: #{tpu_custom_call.1} parent=1 // pred_check
      _
    $region15: #{tpu_custom_call.1} parent=1 // pred_check_branch
      %50 = sbr.rel (0) target = $region17
    $region16: #{tpu_custom_call.1} parent=1 // pred_region
      %s52 = ssub.s32 2304, 2304
      %53 = vsyncadd [#allocation9], %s52
      %s54 = sshll.u32 [#allocation8], 4
      %s55 = int_to_ptr.vmem [resolvable:$true] %s54
      %60 = dma.hbm_to_vmem [thread:$0]  %s3, 2304, %s55, [#allocation9], 256, 256, 16
    $region17: #{tpu_custom_call.1} parent=1 // pred_fallthru
      _
    // Predicated region
    $region18: #{tpu_custom_call.1} parent=1 // pred_check
      _
    $region19: #{tpu_custom_call.1} parent=1 // pred_check_branch
      %62 = sbr.rel (0) target = $region21
    $region20: #{tpu_custom_call.1} parent=1 // pred_region
      %s64 = ssub.s32 32, 32
      %65 = vsyncadd [#allocation9], %s64
      %s67 = sshll.u32 [#allocation10], 4
      %s68 = int_to_ptr.vmem [resolvable:$true] %s67
      %70 = dma.hbm_to_vmem [thread:$0]  %s4, 32, %s68, [#allocation9]
    $region21: #{tpu_custom_call.1} parent=1 // pred_fallthru
      _
    // Predicated region
    $region22: #{tpu_custom_call.1} parent=1 // pred_check
      _
    $region23: #{tpu_custom_call.1} parent=1 // pred_check_branch
      %72 = sbr.rel (0) target = $region25
    $region24: #{tpu_custom_call.1} parent=1 // pred_region
      %s74 = ssub.s32 2304, 2304
      %75 = vsyncadd [#allocation12], %s74
      %s76 = sshll.u32 [#allocation11], 4
      %s77 = int_to_ptr.vmem [resolvable:$true] %s76
      %82 = dma.hbm_to_vmem [thread:$0]  %s5, 2304, %s77, [#allocation12], 128, 128, 8
    $region25: #{tpu_custom_call.1} parent=1 // pred_fallthru
      _
    // Predicated region
    $region26: #{tpu_custom_call.1} parent=1 // pred_check
      _
    $region27: #{tpu_custom_call.1} parent=1 // pred_check_branch
      %84 = sbr.rel (0) target = $region29
    $region28: #{tpu_custom_call.1} parent=1 // pred_region
      %s86 = ssub.s32 16, 16
      %87 = vsyncadd [#allocation12], %s86
      %s89 = sshll.u32 [#allocation13], 4
      %s90 = int_to_ptr.vmem [resolvable:$true] %s89
      %92 = dma.hbm_to_vmem [thread:$0]  %s6, 16, %s90, [#allocation12]
    $region29: #{tpu_custom_call.1} parent=1 // pred_fallthru
      _
    // Predicated region
    $region30: #{tpu_custom_call.1} parent=1 // pred_check
      _
    $region31: #{tpu_custom_call.1} parent=1 // pred_check_branch
      %94 = sbr.rel (0) target = $region33
    $region32: #{tpu_custom_call.1} parent=1 // pred_region
      %95 = dma.done [#allocation3], 128
    $region33: #{tpu_custom_call.1} parent=1 // pred_fallthru
      _
    // Predicated region
    $region34: #{tpu_custom_call.1} parent=1 // pred_check
      _
    $region35: #{tpu_custom_call.1} parent=1 // pred_check_branch
      %97 = sbr.rel (0) target = $region37
    $region36: #{tpu_custom_call.1} parent=1 // pred_region
      %98 = dma.done [#allocation6], 640
    $region37: #{tpu_custom_call.1} parent=1 // pred_fallthru
      _
    // Predicated region
    $region38: #{tpu_custom_call.1} parent=1 // pred_check
      _
    $region39: #{tpu_custom_call.1} parent=1 // pred_check_branch
      %100 = sbr.rel (0) target = $region41
    $region40: #{tpu_custom_call.1} parent=1 // pred_region
      %101 = dma.done [#allocation6], 16
    $region41: #{tpu_custom_call.1} parent=1 // pred_fallthru
      _
    // Predicated region
    $region42: #{tpu_custom_call.1} parent=1 // pred_check
      _
    $region43: #{tpu_custom_call.1} parent=1 // pred_check_branch
      %103 = sbr.rel (0) target = $region45
    $region44: #{tpu_custom_call.1} parent=1 // pred_region
      %104 = dma.done [#allocation9], 2304
    $region45: #{tpu_custom_call.1} parent=1 // pred_fallthru
      _
    // Predicated region
    $region46: #{tpu_custom_call.1} parent=1 // pred_check
      _
    $region47: #{tpu_custom_call.1} parent=1 // pred_check_branch
      %106 = sbr.rel (0) target = $region49
    $region48: #{tpu_custom_call.1} parent=1 // pred_region
      %107 = dma.done [#allocation9], 32
    $region49: #{tpu_custom_call.1} parent=1 // pred_fallthru
      _
    // Predicated region
    $region50: #{tpu_custom_call.1} parent=1 // pred_check
      _
    $region51: #{tpu_custom_call.1} parent=1 // pred_check_branch
      %109 = sbr.rel (0) target = $region53
    $region52: #{tpu_custom_call.1} parent=1 // pred_region
      %110 = dma.done [#allocation12], 2304
    $region53: #{tpu_custom_call.1} parent=1 // pred_fallthru
      _
    // Predicated region
    $region54: #{tpu_custom_call.1} parent=1 // pred_check
      _
    $region55: #{tpu_custom_call.1} parent=1 // pred_check_branch
      %112 = sbr.rel (0) target = $region57
    $region56: #{tpu_custom_call.1} parent=1 // pred_region
      %113 = dma.done [#allocation12], 16
    $region57: #{tpu_custom_call.1} parent=1 // pred_fallthru
      _
    %v114 = vld [vmem:[#allocation2] sm:$0xff]
    %v115 = vld [vmem:[#allocation5] sm:$0xff]
    %v116 = vld [vmem:[#allocation5 + $0x8] sm:$0xff]
    %v117 = vld [vmem:[#allocation5 + $0x10] sm:$0xff]
    %v118 = vld [vmem:[#allocation5 + $0x18] sm:$0xff]
    %v119 = vld [vmem:[#allocation5 + $0x20] sm:$0xf]
    %v120 = vld [vmem:[#allocation7] sm:$0x1]
    %v122 = vlaneseq
    %v123 = vshrl.u32 %v122, 7
    %v124 = vsub.s32 0, %v123
    %v125 = vrot.slane %v120, %v124
    %vm127 = vcmask 293888
    %v129 = vsel %vm127, %v114, 0
    %vm131 = vcmask 1043456
    %v133 = vsel %vm131, %v119, 0
    %135 = vmatprep.subr.mxu0 0.0
    %136 = vmatpush1.msra.mxu0 %v115
    %137 = vmatprep.subr.mxu0 0.0
    %138 = vmatpush1.msra.mxu0 %v116
    %139 = vmatprep.subr.mxu0 0.0
    %140 = vmatpush1.msra.mxu0 %v117
    %141 = vmatprep.subr.mxu0 0.0
    %142 = vmatpush1.msra.mxu0 %v118
    %143 = vmatprep.subr.mxu0 0.0
    %144 = vmatpush1.msra.mxu0 %v133
    %145 = vmatprep.subr.mxu0 0.0
    %146 = vmatpush1.msra.mxu0 0.0
    %147 = vmatprep.subr.mxu0 0.0
    %148 = vmatpush1.msra.mxu0 0.0
    %149 = vmatprep.subr.mxu0 0.0
    %150 = vmatpush1.msra.mxu0 0.0
    %151 = vmatprep.subr.mxu0 0.0
    %152 = vmatpush1.msra.mxu0 0.0
    %153 = vmatprep.subr.mxu0 0.0
    %154 = vmatpush1.msra.mxu0 0.0
    %155 = vmatprep.subr.mxu0 0.0
    %156 = vmatpush1.msra.mxu0 0.0
    %157 = vmatprep.subr.mxu0 0.0
    %158 = vmatpush1.msra.mxu0 0.0
    %159 = vmatprep.subr.mxu0 0.0
    %160 = vmatpush1.msra.mxu0 0.0
    %161 = vmatprep.subr.mxu0 0.0
    %162 = vmatpush1.msra.mxu0 0.0
    %163 = vmatprep.subr.mxu0 0.0
    %164 = vmatpush1.msra.mxu0 0.0
    %165 = vmatprep.subr.mxu0 0.0
    %166 = vmatpush1.msra.mxu0 0.0
    %167 = vmatprep.subr.mxu0 0.0
    %168 = vmatpush1.msra.mxu0 0.0
    %169 = vmatprep.subr.mxu0 0.0
    %170 = vmatpush1.msra.mxu0 0.0
    %171 = vmatprep.subr.mxu0 0.0
    %172 = vmatpush1.msra.mxu0 0.0
    %173 = vmatprep.subr.mxu0 0.0
    %174 = vmatpush1.msra.mxu0 0.0
    %175 = vmatprep.subr.mxu0 0.0
    %176 = vmatpush1.msra.mxu0 0.0
    %177 = vmatprep.subr.mxu0 0.0
    %178 = vmatpush1.msra.mxu0 0.0
    %179 = vmatprep.subr.mxu0 0.0
    %180 = vmatpush1.msra.mxu0 0.0
    %181 = vmatprep.subr.mxu0 0.0
    %182 = vmatpush1.msra.mxu0 0.0
    %183 = vmatprep.subr.mxu0 0.0
    %184 = vmatpush1.msra.mxu0 0.0
    %185 = vmatprep.subr.mxu0 0.0
    %186 = vmatpush1.msra.mxu0 0.0
    %187 = vmatprep.subr.mxu0 0.0
    %188 = vmatpush1.msra.mxu0 0.0
    %189 = vmatprep.subr.mxu0 0.0
    %190 = vmatpush1.msra.mxu0 0.0
    %191 = vmatprep.subr.mxu0 0.0
    %192 = vmatpush1.msra.mxu0 0.0
    %193 = vmatprep.subr.mxu0 0.0
    %194 = vmatpush1.msra.mxu0 0.0
    %195 = vmatprep.subr.mxu0 0.0
    %196 = vmatpush1.msra.mxu0 0.0
    %197 = vmatprep.subr.mxu0 0.0
    %198 = vmatpush1.msra.mxu0 0.0
    %199 = vmatprep.mubr.f32.mxu0 0.0
    %200 = vmatmul.mubr.f32.gmra.mrb[0].mxu0 %v129
    %v201 = vpop.f32.mrb[0].mxu0
    %v202 = vadd.f32 %v125, %v201
    %v203 = vpop.f32.mrb[0].mxu0
    %204 = vdwg.mxu0
    %v205 = vmax.f32 %v202, 0.0
    %v206 = vld [vmem:[#allocation8] sm:$0xff]
    %v207 = vld [vmem:[#allocation8 + $0x8] sm:$0xff]
    %v208 = vld [vmem:[#allocation8 + $0x10] sm:$0xff]
    %v209 = vld [vmem:[#allocation8 + $0x18] sm:$0xff]
    %v210 = vld [vmem:[#allocation8 + $0x20] sm:$0xff]
    %v211 = vld [vmem:[#allocation8 + $0x28] sm:$0xff]
    %v212 = vld [vmem:[#allocation8 + $0x30] sm:$0xff]
    %v213 = vld [vmem:[#allocation8 + $0x38] sm:$0xff]
    %v214 = vld [vmem:[#allocation8 + $0x40] sm:$0xff]
    %v215 = vld [vmem:[#allocation8 + $0x48] sm:$0xff]
    %v216 = vld [vmem:[#allocation8 + $0x50] sm:$0xff]
    %v217 = vld [vmem:[#allocation8 + $0x58] sm:$0xff]
    %v218 = vld [vmem:[#allocation8 + $0x60] sm:$0xff]
    %v219 = vld [vmem:[#allocation8 + $0x68] sm:$0xff]
    %v220 = vld [vmem:[#allocation8 + $0x70] sm:$0xff]
    %v221 = vld [vmem:[#allocation8 + $0x78] sm:$0xff]
    %v222 = vld [vmem:[#allocation8 + $0x80] sm:$0xff]
    %v223 = vld [vmem:[#allocation8 + $0x88] sm:$0xff]
    %v224 = vld [vmem:[#allocation10] sm:$0x3]
    %v226 = vlaneseq
    %v227 = vshrl.u32 %v226, 7
    %v228 = vsub.s32 0, %v227
    %v229 = vrot.slane %v224, %v228
    %v230 = vlaneseq
    %v231 = vshrl.u32 %v230, 7
    %v232 = vsub.s32 1, %v231
    %v233 = vrot.slane %v224, %v232
    %vm236 = vcmask 588800
    %v238 = vsel %vm236, %v205, 0
    %240 = vmatprep.subr.mxu0 %v207
    %241 = vmatpush1.msra.mxu0 %v206
    %242 = vmatprep.subr.mxu0 %v209
    %243 = vmatpush1.msra.mxu0 %v208
    %244 = vmatprep.subr.mxu0 %v211
    %245 = vmatpush1.msra.mxu0 %v210
    %246 = vmatprep.subr.mxu0 %v213
    %247 = vmatpush1.msra.mxu0 %v212
    %248 = vmatprep.subr.mxu0 %v215
    %249 = vmatpush1.msra.mxu0 %v214
    %250 = vmatprep.subr.mxu0 %v217
    %251 = vmatpush1.msra.mxu0 %v216
    %252 = vmatprep.subr.mxu0 %v219
    %253 = vmatpush1.msra.mxu0 %v218
    %254 = vmatprep.subr.mxu0 %v221
    %255 = vmatpush1.msra.mxu0 %v220
    %256 = vmatprep.subr.mxu0 %v223
    %257 = vmatpush1.msra.mxu0 %v222
    %258 = vmatprep.subr.mxu0 0.0
    %259 = vmatpush1.msra.mxu0 0.0
    %260 = vmatprep.subr.mxu0 0.0
    %261 = vmatpush1.msra.mxu0 0.0
    %262 = vmatprep.subr.mxu0 0.0
    %263 = vmatpush1.msra.mxu0 0.0
    %264 = vmatprep.subr.mxu0 0.0
    %265 = vmatpush1.msra.mxu0 0.0
    %266 = vmatprep.subr.mxu0 0.0
    %267 = vmatpush1.msra.mxu0 0.0
    %268 = vmatprep.subr.mxu0 0.0
    %269 = vmatpush1.msra.mxu0 0.0
    %270 = vmatprep.subr.mxu0 0.0
    %271 = vmatpush1.msra.mxu0 0.0
    %272 = vmatprep.subr.mxu0 0.0
    %273 = vmatpush1.msra.mxu0 0.0
    %274 = vmatprep.subr.mxu0 0.0
    %275 = vmatpush1.msra.mxu0 0.0
    %276 = vmatprep.subr.mxu0 0.0
    %277 = vmatpush1.msra.mxu0 0.0
    %278 = vmatprep.subr.mxu0 0.0
    %279 = vmatpush1.msra.mxu0 0.0
    %280 = vmatprep.subr.mxu0 0.0
    %281 = vmatpush1.msra.mxu0 0.0
    %282 = vmatprep.subr.mxu0 0.0
    %283 = vmatpush1.msra.mxu0 0.0
    %284 = vmatprep.subr.mxu0 0.0
    %285 = vmatpush1.msra.mxu0 0.0
    %286 = vmatprep.subr.mxu0 0.0
    %287 = vmatpush1.msra.mxu0 0.0
    %288 = vmatprep.subr.mxu0 0.0
    %289 = vmatpush1.msra.mxu0 0.0
    %290 = vmatprep.subr.mxu0 0.0
    %291 = vmatpush1.msra.mxu0 0.0
    %292 = vmatprep.subr.mxu0 0.0
    %293 = vmatpush1.msra.mxu0 0.0
    %294 = vmatprep.subr.mxu0 0.0
    %295 = vmatpush1.msra.mxu0 0.0
    %296 = vmatprep.subr.mxu0 0.0
    %297 = vmatpush1.msra.mxu0 0.0
    %298 = vmatprep.subr.mxu0 0.0
    %299 = vmatpush1.msra.mxu0 0.0
    %300 = vmatprep.subr.mxu0 0.0
    %301 = vmatpush1.msra.mxu0 0.0
    %302 = vmatprep.subr.mxu0 0.0
    %303 = vmatpush1.msra.mxu0 0.0
    %304 = vmatprep.mubr.f32.mxu0 0.0
    %305 = vmatmul.mubr.f32.gmra.mrb[0].mxu0 %v238
    %v306 = vpop.f32.mrb[0].mxu0
    %v307 = vadd.f32 %v229, %v306
    %v308 = vpop.f32.mrb[0].mxu0
    %v309 = vadd.f32 %v233, %v308
    %310 = vdwg.mxu0
    %v311 = vmax.f32 %v307, 0.0
    %v312 = vmax.f32 %v309, 0.0
    %v313 = vld [vmem:[#allocation11] sm:$0xff]
    %v314 = vld [vmem:[#allocation11 + $0x8] sm:$0xff]
    %v315 = vld [vmem:[#allocation11 + $0x10] sm:$0xff]
    %v316 = vld [vmem:[#allocation11 + $0x18] sm:$0xff]
    %v317 = vld [vmem:[#allocation11 + $0x20] sm:$0xff]
    %v318 = vld [vmem:[#allocation11 + $0x28] sm:$0xff]
    %v319 = vld [vmem:[#allocation11 + $0x30] sm:$0xff]
    %v320 = vld [vmem:[#allocation11 + $0x38] sm:$0xff]
    %v321 = vld [vmem:[#allocation11 + $0x40] sm:$0xff]
    %v322 = vld [vmem:[#allocation11 + $0x48] sm:$0xff]
    %v323 = vld [vmem:[#allocation11 + $0x50] sm:$0xff]
    %v324 = vld [vmem:[#allocation11 + $0x58] sm:$0xff]
    %v325 = vld [vmem:[#allocation11 + $0x60] sm:$0xff]
    %v326 = vld [vmem:[#allocation11 + $0x68] sm:$0xff]
    %v327 = vld [vmem:[#allocation11 + $0x70] sm:$0xff]
    %v328 = vld [vmem:[#allocation11 + $0x78] sm:$0xff]
    %v329 = vld [vmem:[#allocation11 + $0x80] sm:$0xff]
    %v330 = vld [vmem:[#allocation11 + $0x88] sm:$0xff]
    %v331 = vld [vmem:[#allocation13] sm:$0x1]
    %v333 = vlaneseq
    %v334 = vshrl.u32 %v333, 7
    %v335 = vsub.s32 0, %v334
    %v336 = vrot.slane %v331, %v335
    %vm338 = vcmask 130048
    %v340 = vsel %vm338, %v312, 0
    %342 = vmatprep.subr.mxu0 0.0
    %343 = vmatpush1.msra.mxu0 %v313
    %344 = vmatprep.subr.mxu0 0.0
    %345 = vmatpush1.msra.mxu0 %v314
    %346 = vmatprep.subr.mxu0 0.0
    %347 = vmatpush1.msra.mxu0 %v315
    %348 = vmatprep.subr.mxu0 0.0
    %349 = vmatpush1.msra.mxu0 %v316
    %350 = vmatprep.subr.mxu0 0.0
    %351 = vmatpush1.msra.mxu0 %v317
    %352 = vmatprep.subr.mxu0 0.0
    %353 = vmatpush1.msra.mxu0 %v318
    %354 = vmatprep.subr.mxu0 0.0
    %355 = vmatpush1.msra.mxu0 %v319
    %356 = vmatprep.subr.mxu0 0.0
    %357 = vmatpush1.msra.mxu0 %v320
    %358 = vmatprep.subr.mxu0 0.0
    %359 = vmatpush1.msra.mxu0 %v321
    %360 = vmatprep.subr.mxu0 0.0
    %361 = vmatpush1.msra.mxu0 %v322
    %362 = vmatprep.subr.mxu0 0.0
    %363 = vmatpush1.msra.mxu0 %v323
    %364 = vmatprep.subr.mxu0 0.0
    %365 = vmatpush1.msra.mxu0 %v324
    %366 = vmatprep.subr.mxu0 0.0
    %367 = vmatpush1.msra.mxu0 %v325
    %368 = vmatprep.subr.mxu0 0.0
    %369 = vmatpush1.msra.mxu0 %v326
    %370 = vmatprep.subr.mxu0 0.0
    %371 = vmatpush1.msra.mxu0 %v327
    %372 = vmatprep.subr.mxu0 0.0
    %373 = vmatpush1.msra.mxu0 %v328
    %374 = vmatprep.subr.mxu0 0.0
    %375 = vmatpush1.msra.mxu0 %v329
    %376 = vmatprep.subr.mxu0 0.0
    %377 = vmatpush1.msra.mxu0 %v330
    %378 = vmatprep.subr.mxu0 0.0
    %379 = vmatpush1.msra.mxu0 0.0
    %380 = vmatprep.subr.mxu0 0.0
    %381 = vmatpush1.msra.mxu0 0.0
    %382 = vmatprep.subr.mxu0 0.0
    %383 = vmatpush1.msra.mxu0 0.0
    %384 = vmatprep.subr.mxu0 0.0
    %385 = vmatpush1.msra.mxu0 0.0
    %386 = vmatprep.subr.mxu0 0.0
    %387 = vmatpush1.msra.mxu0 0.0
    %388 = vmatprep.subr.mxu0 0.0
    %389 = vmatpush1.msra.mxu0 0.0
    %390 = vmatprep.subr.mxu0 0.0
    %391 = vmatpush1.msra.mxu0 0.0
    %392 = vmatprep.subr.mxu0 0.0
    %393 = vmatpush1.msra.mxu0 0.0
    %394 = vmatprep.subr.mxu0 0.0
    %395 = vmatpush1.msra.mxu0 0.0
    %396 = vmatprep.subr.mxu0 0.0
    %397 = vmatpush1.msra.mxu0 0.0
    %398 = vmatprep.subr.mxu0 0.0
    %399 = vmatpush1.msra.mxu0 0.0
    %400 = vmatprep.subr.mxu0 0.0
    %401 = vmatpush1.msra.mxu0 0.0
    %402 = vmatprep.subr.mxu0 0.0
    %403 = vmatpush1.msra.mxu0 0.0
    %404 = vmatprep.subr.mxu0 0.0
    %405 = vmatpush1.msra.mxu0 0.0
    %406 = vmatprep.mubr.f32.mxu0 %v340
    %407 = vmatmul.mubr.f32.gmra.mrb[0].mxu0 %v311
    %v408 = vpop.f32.mrb[0].mxu0
    %v409 = vadd.f32 %v336, %v408
    %v410 = vpop.f32.mrb[0].mxu0
    %411 = vdwg.mxu0
    %v412 = vmax.f32 %v409, 0.0
    %413 = vst.msk [vmem:[#allocation14] sm:$0xff] %vm127, %v412
    // Predicated region
    $region58: #{tpu_custom_call.1} parent=1 // pred_check
      _
    $region59: #{tpu_custom_call.1} parent=1 // pred_check_branch
      %415 = sbr.rel (0) target = $region61
    $region60: #{tpu_custom_call.1} parent=1 // pred_region
      %s417 = ssub.s32 128, 128
      %418 = vsyncadd [#allocation4], %s417
      %s420 = sshll.u32 [#allocation14], 4
      %s421 = int_to_ptr.vmem [resolvable:$true] %s420
      %423 = dma.vmem_to_hbm [thread:$0]  %s421, 128, %s7, [#allocation4]
    $region61: #{tpu_custom_call.1} parent=1 // pred_fallthru
      _
    // Predicated region
    $region62: #{tpu_custom_call.1} parent=1 // pred_check
      _
    $region63: #{tpu_custom_call.1} parent=1 // pred_check_branch
      %425 = sbr.rel (0) target = $region65
    $region64: #{tpu_custom_call.1} parent=1 // pred_region
      %426 = dma.done [#allocation4], 128
    $region65: #{tpu_custom_call.1} parent=1 // pred_fallthru
      _
    %427 = vsyncpa [#allocation3], 1
    %428 = vsyncpa [#allocation6], 1
    %429 = vsyncpa [#allocation9], 1
    %430 = vsyncpa [#allocation12], 1
    %431 = vsyncpa [#allocation4], 1

</llo_original>
